<compile_context>
chip_gen: v7x
topology: tpu7x:2x2x1
jax: 0.10.0
libtpu: 0.0.40
codegen_flags: <defaults>
</compile_context>

<pallas_src>
import functools

import jax
import jax.numpy as jnp
from jax.experimental import pallas as pl
from jax.experimental.pallas import tpu as pltpu


def _moe_kernel(active_ref, x_ref, dw_ref, w1_ref, w3_ref, w2_ref, o_ref):
    """Grid = (token_tiles, num_experts, H_tiles).

    The output block is resident across the (expert, H) axes and is used as the
    f32 accumulator.  active_ref is an SMEM (token_tiles, E) mask from scalar
    prefetch; inactive (tile, expert) pairs skip all compute.
    """
    i = pl.program_id(0)          # token tile
    e = pl.program_id(1)          # expert
    h = pl.program_id(2)          # hidden (H) tile

    @pl.when(jnp.logical_and(e == 0, h == 0))
    def _():
        o_ref[...] = jnp.zeros_like(o_ref)

    @pl.when(active_ref[i, e] > 0)
    def _():
        x = x_ref[...]                                                    # (tm, D) bf16
        # SwiGLU slice over this H tile: silu(x @ W1[:, h]) * (x @ W3[:, h])
        h1 = jnp.dot(x, w1_ref[...], preferred_element_type=jnp.float32)  # (tm, th) f32
        h3 = jnp.dot(x, w3_ref[...], preferred_element_type=jnp.float32)  # (tm, th) f32
        g = (h1 * jax.nn.sigmoid(h1)) * h3                                # f32
        part = jnp.dot(g.astype(w2_ref.dtype), w2_ref[...],
                       preferred_element_type=jnp.float32)                # (tm, D) f32
        # dw_ref is the (tm, 1) routing weight column for expert e (0 if not top-k).
        o_ref[...] += dw_ref[...] * part


@functools.partial(jax.jit, static_argnames=("tm", "th", "top_k"))
def moe_forward(x, wg, w1, w3, w2, tm=128, th=512, top_k=2):
    """x: (T, D) f32. Returns (T, D) f32, matching JaxMoeLayer.forward semantics.

    tm: token tile (multiple of 16; 128 on v5e, 256 on v6e/v7x recommended).
    th: hidden (H) tile (multiple of 128 or == H); re-derive smaller on v7x (64 MiB VMEM).
    """
    T, D = x.shape
    E = wg.shape[1]
    H = w1.shape[2]

    th = min(th, H)
    assert H % th == 0, "H must be divisible by the hidden tile th"
    assert tm % 16 == 0, "tm must be a multiple of 16 (bf16 sublane packing)"

    # ---------------- routing glue (top_k / softmax / scatter) ----------------
    # TODO(synk): fully grouped (sorted-by-expert, megablox-style) routing via
    # PrefetchScalarGridSpec group offsets would also remove the wasted weight
    # DMA for inactive (tile, expert) pairs; here we only skip the compute.
    gate_logits = x @ wg                                            # (T, E) f32
    top_w, top_i = jax.lax.top_k(gate_logits, top_k)
    top_w = jax.nn.softmax(top_w, axis=1).astype(jnp.float32)
    dense_w = jnp.sum(jax.nn.one_hot(top_i, E, dtype=jnp.float32)
                      * top_w[..., None], axis=1)                   # (T, E)

    # Pad tokens to a multiple of tm; padded rows get zero routing weight.
    n_tiles = pl.cdiv(T, tm)
    t_pad = n_tiles * tm
    pad = t_pad - T
    x_p = jnp.pad(x, ((0, pad), (0, 0)))
    dw_p = jnp.pad(dense_w, ((0, pad), (0, 0)))

    # (token_tile, expert) activity mask -> SMEM via scalar prefetch.
    active = (jnp.max(dw_p.reshape(n_tiles, tm, E), axis=1) > 0.0).astype(jnp.int32)

    # Expert-major routing weights so the BlockSpec hands the kernel one column.
    dw_t = jnp.transpose(dw_p).reshape(E, t_pad, 1)                 # (E, T_pad, 1) f32

    # bf16 operands, f32 accumulation inside the kernel.
    x_bf = x_p.astype(jnp.bfloat16)
    w1_bf = w1.astype(jnp.bfloat16)
    w3_bf = w3.astype(jnp.bfloat16)
    w2_bf = w2.astype(jnp.bfloat16)

    grid = (n_tiles, E, H // th)
    out = pl.pallas_call(
        _moe_kernel,
        out_shape=jax.ShapeDtypeStruct((t_pad, D), jnp.float32),
        grid_spec=pltpu.PrefetchScalarGridSpec(
            num_scalar_prefetch=1,                                   # active mask -> SMEM
            grid=grid,
            in_specs=[
                pl.BlockSpec((tm, D), lambda i, e, h, act: (i, 0)),           # x tile
                pl.BlockSpec((None, tm, 1), lambda i, e, h, act: (e, i, 0)),  # routing col
                pl.BlockSpec((None, D, th), lambda i, e, h, act: (e, 0, h)),  # W1[e] h-slice
                pl.BlockSpec((None, D, th), lambda i, e, h, act: (e, 0, h)),  # W3[e] h-slice
                pl.BlockSpec((None, th, D), lambda i, e, h, act: (e, h, 0)),  # W2[e] h-slice
            ],
            out_specs=pl.BlockSpec((tm, D), lambda i, e, h, act: (i, 0)),
        ),
        compiler_params=pltpu.CompilerParams(
            dimension_semantics=("parallel", "arbitrary", "arbitrary"),
            vmem_limit_bytes=64 * 1024 * 1024,
        ),
    )(active, x_bf, dw_t, w1_bf, w3_bf, w2_bf)
    return out[:T]


def _reference(x, wg, w1, w3, w2):
    """Pure-JAX reference mirroring JaxMoeLayer.forward (dense-equivalent form),
    using the same bf16-operand / f32-accumulation numerics as the kernel."""
    E = wg.shape[1]
    gate_logits = x @ wg
    top_w, top_i = jax.lax.top_k(gate_logits, 2)
    top_w = jax.nn.softmax(top_w, axis=1).astype(jnp.float32)
    dense_w = jnp.sum(jax.nn.one_hot(top_i, E, dtype=jnp.float32)
                      * top_w[..., None], axis=1)
    xb = x.astype(jnp.bfloat16)
    out = jnp.zeros_like(x)
    for e in range(E):
        h1 = jnp.dot(xb, w1[e].astype(jnp.bfloat16), preferred_element_type=jnp.float32)
        h3 = jnp.dot(xb, w3[e].astype(jnp.bfloat16), preferred_element_type=jnp.float32)
        g = (h1 * jax.nn.sigmoid(h1)) * h3
        eo = jnp.dot(g.astype(jnp.bfloat16), w2[e].astype(jnp.bfloat16),
                     preferred_element_type=jnp.float32)
        out = out + dense_w[:, e:e + 1] * eo
    return out


if __name__ == "__main__":
    # Small shapes: T=48 tokens, D=128 model dim, H=256 ffn hidden, E=4 experts, top-2.
    T, D, H, E = 48, 128, 256, 4

    key = jax.random.PRNGKey(0)
    kx, kg, k1, k3, k2 = jax.random.split(key, 5)
    x = jax.random.normal(kx, (T, D), dtype=jnp.float32)
    wg = jax.random.normal(kg, (D, E), dtype=jnp.float32) * 0.1   # gate Linear (no bias)
    w1 = jax.random.normal(k1, (E, D, H), dtype=jnp.float32) * 0.1
    w3 = jax.random.normal(k3, (E, D, H), dtype=jnp.float32) * 0.1
    w2 = jax.random.normal(k2, (E, H, D), dtype=jnp.float32) * 0.1

    # tm=32 / th=128 keep the test tiny while exercising token padding
    # (48 -> 64) and the H-tiled reduction axis (256 -> 2 tiles of 128).
    out = moe_forward(x, wg, w1, w3, w2, tm=32, th=128)
    out = jax.block_until_ready(out)

    ref = jax.block_until_ready(_reference(x, wg, w1, w3, w2))
    assert out.shape == (T, D) and out.dtype == jnp.float32
    assert jnp.allclose(out, ref, atol=1e-2, rtol=1e-2), "Pallas MoE mismatch vs reference"

    print("KERNEL_OK")
</pallas_src>

<mosaic_0001>
module attributes {stable_mosaic.version = 11 : i64} {
  func.func @_moe_kernel(%arg0: i32, %arg1: i32, %arg2: i32, %arg3: memref<2x4xi32, #tpu.memory_space<smem>>, %arg4: memref<32x128xbf16, #tpu.memory_space<vmem>>, %arg5: memref<1x32x1xf32, #tpu.memory_space<vmem>>, %arg6: memref<1x128x128xbf16, #tpu.memory_space<vmem>>, %arg7: memref<1x128x128xbf16, #tpu.memory_space<vmem>>, %arg8: memref<1x128x128xbf16, #tpu.memory_space<vmem>>, %arg9: memref<32x128xf32, #tpu.memory_space<vmem>>) attributes {dimension_semantics = [#tpu.dimension_semantics<parallel>, #tpu.dimension_semantics<arbitrary>, #tpu.dimension_semantics<arbitrary>], iteration_bounds = array<i64: 2, 4, 2>, scalar_prefetch = 1 : i64, scratch_operands = 0 : i64, tpu.core_type = #tpu.core_type<tc>, window_params = [{transform_indices = @transform_0, window_bounds = array<i64: 32, 128>}, {transform_indices = @transform_1, window_bounds = array<i64: 1, 32, 1>}, {transform_indices = @transform_2, window_bounds = array<i64: 1, 128, 128>}, {transform_indices = @transform_3, window_bounds = array<i64: 1, 128, 128>}, {transform_indices = @transform_4, window_bounds = array<i64: 1, 128, 128>}, {transform_indices = @transform_5, window_bounds = array<i64: 32, 128>}]} {
    %c0_i32 = arith.constant 0 : i32
    %0 = arith.cmpi eq, %arg1, %c0_i32 : i32
    %c0_i32_0 = arith.constant 0 : i32
    %1 = arith.cmpi eq, %arg2, %c0_i32_0 : i32
    %2 = arith.andi %0, %1 : i1
    %3 = arith.extui %2 : i1 to i32
    %c0_i32_1 = arith.constant 0 : i32
    %4 = arith.cmpi ne, %3, %c0_i32_1 : i32
    scf.if %4 {
      %cst = arith.constant 0.000000e+00 : f32
      %11 = vector.broadcast %cst : f32 to vector<32x128xf32>
      %c0 = arith.constant 0 : index
      %c0_4 = arith.constant 0 : index
      %12 = vector.load %arg9[%c0, %c0_4] : memref<32x128xf32, #tpu.memory_space<vmem>>, vector<32x128xf32>
      tpu.vector_store %arg9[%c0, %c0_4], %11 {strides = array<i32>} : memref<32x128xf32, #tpu.memory_space<vmem>>, vector<32x128xf32>,
    } else {
    }
    %5 = arith.index_cast %arg0 : i32 to index
    %6 = arith.index_cast %arg1 : i32 to index
    %7 = memref.load %arg3[%5, %6] : memref<2x4xi32, #tpu.memory_space<smem>>
    %c0_i32_2 = arith.constant 0 : i32
    %8 = arith.cmpi sgt, %7, %c0_i32_2 : i32
    %9 = arith.extui %8 : i1 to i32
    %c0_i32_3 = arith.constant 0 : i32
    %10 = arith.cmpi ne, %9, %c0_i32_3 : i32
    scf.if %10 {
      %c0 = arith.constant 0 : index
      %c0_4 = arith.constant 0 : index
      %11 = vector.load %arg4[%c0, %c0_4] : memref<32x128xbf16, #tpu.memory_space<vmem>>, vector<32x128xbf16>
      %c0_5 = arith.constant 0 : index
      %c0_6 = arith.constant 0 : index
      %c0_7 = arith.constant 0 : index
      %12 = vector.load %arg6[%c0_5, %c0_6, %c0_7] : memref<1x128x128xbf16, #tpu.memory_space<vmem>>, vector<1x128x128xbf16>
      %13 = vector.shape_cast %12 : vector<1x128x128xbf16> to vector<128x128xbf16>
      %cst = arith.constant dense<0.000000e+00> : vector<32x128xf32>
      %14 = tpu.matmul %11, %13, %cst {dimension_numbers = #tpu.dot_dimension_numbers<[1], [0], [0], [1], [0, 0, 1, 1], [], []>} : vector<32x128xbf16>, vector<128x128xbf16>, vector<32x128xf32> -> vector<32x128xf32>
      %c0_8 = arith.constant 0 : index
      %c0_9 = arith.constant 0 : index
      %c0_10 = arith.constant 0 : index
      %15 = vector.load %arg7[%c0_8, %c0_9, %c0_10] : memref<1x128x128xbf16, #tpu.memory_space<vmem>>, vector<1x128x128xbf16>
      %16 = vector.shape_cast %15 : vector<1x128x128xbf16> to vector<128x128xbf16>
      %cst_11 = arith.constant dense<0.000000e+00> : vector<32x128xf32>
      %17 = tpu.matmul %11, %16, %cst_11 {dimension_numbers = #tpu.dot_dimension_numbers<[1], [0], [0], [1], [0, 0, 1, 1], [], []>} : vector<32x128xbf16>, vector<128x128xbf16>, vector<32x128xf32> -> vector<32x128xf32>
      %18 = arith.negf %14 : vector<32x128xf32>
      %19 = math.exp %18 : vector<32x128xf32>
      %cst_12 = arith.constant 1.000000e+00 : f32
      %20 = vector.broadcast %cst_12 : f32 to vector<32x128xf32>
      %21 = arith.addf %20, %19 : vector<32x128xf32>
      %22 = arith.divf %20, %21 : vector<32x128xf32>
      %23 = arith.mulf %14, %22 : vector<32x128xf32>
      %24 = arith.mulf %23, %17 : vector<32x128xf32>
      %25 = arith.truncf %24 : vector<32x128xf32> to vector<32x128xbf16>
      %c0_13 = arith.constant 0 : index
      %c0_14 = arith.constant 0 : index
      %c0_15 = arith.constant 0 : index
      %26 = vector.load %arg8[%c0_13, %c0_14, %c0_15] : memref<1x128x128xbf16, #tpu.memory_space<vmem>>, vector<1x128x128xbf16>
      %27 = vector.shape_cast %26 : vector<1x128x128xbf16> to vector<128x128xbf16>
      %cst_16 = arith.constant dense<0.000000e+00> : vector<32x128xf32>
      %28 = tpu.matmul %25, %27, %cst_16 {dimension_numbers = #tpu.dot_dimension_numbers<[1], [0], [0], [1], [0, 0, 1, 1], [], []>} : vector<32x128xbf16>, vector<128x128xbf16>, vector<32x128xf32> -> vector<32x128xf32>
      %c0_17 = arith.constant 0 : index
      %c0_18 = arith.constant 0 : index
      %29 = vector.load %arg9[%c0_17, %c0_18] : memref<32x128xf32, #tpu.memory_space<vmem>>, vector<32x128xf32>
      %c0_19 = arith.constant 0 : index
      %c0_20 = arith.constant 0 : index
      %c0_21 = arith.constant 0 : index
      %30 = vector.load %arg5[%c0_19, %c0_20, %c0_21] : memref<1x32x1xf32, #tpu.memory_space<vmem>>, vector<1x32x1xf32>
      %31 = vector.shape_cast %30 : vector<1x32x1xf32> to vector<32x1xf32>
      %32 = vector.broadcast %31 : vector<32x1xf32> to vector<32x128xf32>
      %33 = arith.mulf %32, %28 : vector<32x128xf32>
      %34 = arith.addf %29, %33 : vector<32x128xf32>
      %c0_22 = arith.constant 0 : index
      %c0_23 = arith.constant 0 : index
      %35 = vector.load %arg9[%c0_22, %c0_23] : memref<32x128xf32, #tpu.memory_space<vmem>>, vector<32x128xf32>
      tpu.vector_store %arg9[%c0_22, %c0_23], %34 {strides = array<i32>} : memref<32x128xf32, #tpu.memory_space<vmem>>, vector<32x128xf32>,
    } else {
    }
    return
  }
  func.func @transform_0(%arg0: i32, %arg1: i32, %arg2: i32, %arg3: memref<2x4xi32, #tpu.memory_space<smem>>) -> (i32, i32) {
    %c0_i32 = arith.constant 0 : i32
    %c0_i32_0 = arith.constant 0 : i32
    return %arg0, %c0_i32 : i32, i32
  }
  func.func @transform_1(%arg0: i32, %arg1: i32, %arg2: i32, %arg3: memref<2x4xi32, #tpu.memory_space<smem>>) -> (i32, i32, i32) {
    %c0_i32 = arith.constant 0 : i32
    %c0_i32_0 = arith.constant 0 : i32
    return %arg1, %arg0, %c0_i32 : i32, i32, i32
  }
  func.func @transform_2(%arg0: i32, %arg1: i32, %arg2: i32, %arg3: memref<2x4xi32, #tpu.memory_space<smem>>) -> (i32, i32, i32) {
    %c0_i32 = arith.constant 0 : i32
    %c0_i32_0 = arith.constant 0 : i32
    return %arg1, %c0_i32, %arg2 : i32, i32, i32
  }
  func.func @transform_3(%arg0: i32, %arg1: i32, %arg2: i32, %arg3: memref<2x4xi32, #tpu.memory_space<smem>>) -> (i32, i32, i32) {
    %c0_i32 = arith.constant 0 : i32
    %c0_i32_0 = arith.constant 0 : i32
    return %arg1, %c0_i32, %arg2 : i32, i32, i32
  }
  func.func @transform_4(%arg0: i32, %arg1: i32, %arg2: i32, %arg3: memref<2x4xi32, #tpu.memory_space<smem>>) -> (i32, i32, i32) {
    %c0_i32 = arith.constant 0 : i32
    %c0_i32_0 = arith.constant 0 : i32
    return %arg1, %arg2, %c0_i32 : i32, i32, i32
  }
  func.func @transform_5(%arg0: i32, %arg1: i32, %arg2: i32, %arg3: memref<2x4xi32, #tpu.memory_space<smem>>) -> (i32, i32) {
    %c0_i32 = arith.constant 0 : i32
    %c0_i32_0 = arith.constant 0 : i32
    return %arg0, %c0_i32 : i32, i32
  }
}

</mosaic_0001>

<llo_original>
// kernel: moe_forward.1
$region0: #{moe_forward.1}
  #allocation0 [shape = 'u32[]', space=smem, size = 0x4, offset = 0x4, fixed_abs, tag = 'smem constant byte address 0x4 - core index']
  #allocation1 [shape = 'u32[144,128]{1,0:T(1,128)}', space=vmem, size = 0x12000, scoped, tag = 'internal scratch']
  #allocation2 [shape = 's32[1]{0}', space=sflag, size = 0x4, scoped, tag = 'scoped memory for moe_forward.1']
  #allocation3 [shape = 'u8[1024]{0}', space=smem, size = 0x400, scoped, tag = 'prefetched SMEM operand 0']
  %s0 = inlined_call_operand.hbm [shape: s32[2,4], index: 0, kind: input, shape index: {}]
  %s1 = inlined_call_operand.hbm [shape: bf16[64,128], index: 1, kind: input, shape index: {}]
  %s2 = inlined_call_operand.hbm [shape: f32[4,64,1], index: 2, kind: input, shape index: {}]
  %s3 = inlined_call_operand.hbm [shape: bf16[4,128,256], index: 3, kind: input, shape index: {}]
  %s4 = inlined_call_operand.hbm [shape: bf16[4,128,256], index: 4, kind: input, shape index: {}]
  %s5 = inlined_call_operand.hbm [shape: bf16[4,256,128], index: 5, kind: input, shape index: {}]
  %s6 = inlined_call_operand.hbm [shape: f32[64,128], index: 6, kind: output, shape index: {}]
  %s7 = sld [smem:[#allocation0]]
  $region81: #{moe_forward.1} parent=0
    _
  %s9 = ssub.s32 1, %s7
  %s10 = scalar_select 0, %s9, %s7
  %12 = dma.hbm_to_smem %s0, 32, [#allocation3], [#allocation2]
  %13 = dma.done [#allocation2], 32
  %14 = sfence
  $region1: #{moe_forward.1} parent=0
    #allocation4 [shape = 'u8[16384]{0}', space=vmem, size = 0x4000, scoped, tag = 'input window, operand 1']
    #allocation5 [shape = 's32[2]{0}', space=sflag, size = 0x8, scoped, tag = 'scoped memory for moe_forward.1']
    #allocation6 [shape = 's32[2]{0}', space=sflag, size = 0x8, scoped, tag = 'scoped memory for moe_forward.1']
    #allocation7 [shape = 'u8[32768]{0}', space=vmem, size = 0x8000, scoped, tag = 'input window, operand 2']
    #allocation8 [shape = 's32[2]{0}', space=sflag, size = 0x8, scoped, tag = 'scoped memory for moe_forward.1']
    #allocation9 [shape = 'u8[65536]{0}', space=vmem, size = 0x10000, scoped, tag = 'input window, operand 3']
    #allocation10 [shape = 'u8[65536]{0}', space=vmem, size = 0x10000, scoped, tag = 'input window, operand 4']
    #allocation11 [shape = 's32[2]{0}', space=sflag, size = 0x8, scoped, tag = 'scoped memory for moe_forward.1']
    #allocation12 [shape = 'u8[65536]{0}', space=vmem, size = 0x10000, scoped, tag = 'input window, operand 5']
    #allocation13 [shape = 'u8[32768]{0}', space=vmem, size = 0x8000, scoped, tag = 'output window, operand 0']
    %15 = vsyncpa [#allocation5], 0
    %s16 = scalar_lea.sflag [#allocation5], 1
    %17 = vsyncpa %s16, 0
    %18 = vsyncpa [#allocation8], 0
    %s19 = scalar_lea.sflag [#allocation8], 1
    %20 = vsyncpa %s19, 0
    %21 = vsyncpa [#allocation11], 0
    %s22 = scalar_lea.sflag [#allocation11], 1
    %23 = vsyncpa %s22, 0
    %24 = vsyncpa [#allocation6], 0
    %s25 = scalar_lea.sflag [#allocation6], 1
    %26 = vsyncpa %s25, 0
    loop: start=0, step=1, limit=18
    $region2: #{moe_forward.1} parent=1 // loop_pre_header
      _
    $region3: #{moe_forward.1} parent=1 // loop_header
      %s28 = sphi 0, %s32
      %p29 = scmp.ge.s32.totalorder %s28, 18
      %s35 = sphi 0, %s54
      %s36 = sphi 0, %s50
      %s37 = sphi 0, %s46
      %s38 = sphi 0, %s35
      %s39 = sphi 0, %s36
      %s40 = sphi 0, %s37
      %s41 = sphi 0, %s38
      %s42 = sphi 0, %s39
      %s43 = sphi 0, %s40
      %s57 = sphi 0, %s59
      %s60 = sphi 0, %s57
      %s61 = sphi 0, %s60
      %s77 = sphi 0, %s61
      %s85 = sphi 0, %s87
      %s88 = sphi 0, %s85
      %s89 = sphi 0, %s88
      %s105 = sphi 0, %s89
      %s113 = sphi 0, %s115
      %s116 = sphi 0, %s113
      %s117 = sphi 0, %s116
      %s133 = sphi 0, %s117
      %s141 = sphi 0, %s143
      %s144 = sphi 0, %s141
      %s145 = sphi 0, %s144
      %s161 = sphi 0, %s145
      %s169 = sphi 0, %s171
      %s172 = sphi 0, %s169
      %s173 = sphi 0, %s172
      %s189 = sphi 0, %s173
      %s195 = sphi 0, %s197
      %s198 = sphi 0, %s195
      %s199 = sphi 0, %s198
      %s215 = sphi 0, %s199
    $region4: #{moe_forward.1} parent=1 // loop_header_branch
      %31 = sbr.rel (%p29) target = $region8
    $region5: #{moe_forward.1} parent=1 // loop_body
      %s33 = ssub.s32 %s28, 1
      %s34 = ssub.s32 %s28, 2
      %s44 = sadd.s32 1, %s37
      %p45 = scmp.ge.s32.totalorder %s44, 2
      %s46 = scalar_select %p45, 0, %s44
      %s47 = sadd.s32 1, %s36
      %s48 = scalar_select %p45, %s47, %s36
      %p49 = scmp.ge.s32.totalorder %s48, 4
      %s50 = scalar_select %p49, 0, %s48
      %s51 = sadd.s32 1, %s35
      %s52 = scalar_select %p49, %s51, %s35
      %p53 = scmp.ge.s32.totalorder %s52, 2
      %s54 = scalar_select %p53, 0, %s52
      %s55 = ssub.s32 %s35, %s54
      %p56 = scmp.eq.s32.totalorder %s55, 0
      %s58 = sadd.s32 %s57, 1
      %s59 = scalar_select %p56, %s57, %s58
      %p62 = pneg %p56
      %p63 = scmp.eq.s32.totalorder %s28, 15
      %p64 = por %p62, %p63
      %p65 = scmp.ne.s32.totalorder %s57, %s60
      %p66 = scmp.eq.s32.totalorder %s28, 0
      %p67 = por %p65, %p66
      %p68 = scmp.ne.s32.totalorder %s57, %s60
      %p69 = scmp.eq.s32.totalorder %s33, 15
      %p70 = por %p68, %p69
      %p71 = scmp.ne.s32.totalorder %s60, %s61
      %p72 = scmp.eq.s32.totalorder %s33, 0
      %p73 = por %p71, %p72
      %p74 = scmp.ne.s32.totalorder %s60, %s61
      %p75 = scmp.eq.s32.totalorder %s34, 15
      %p76 = por %p74, %p75
      %p78 = scmp.ne.s32.totalorder %s61, %s77
      %p79 = scmp.eq.s32.totalorder %s34, 0
      %p80 = por %p78, %p79
      %s81 = ssub.s32 %s36, %s50
      %s82 = ssub.s32 %s35, %s54
      %s83 = sor.u32 %s81, %s82
      %p84 = scmp.eq.s32.totalorder %s83, 0
      %s86 = sadd.s32 %s85, 1
      %s87 = scalar_select %p84, %s85, %s86
      %p90 = pneg %p84
      %p91 = scmp.eq.s32.totalorder %s28, 15
      %p92 = por %p90, %p91
      %p93 = scmp.ne.s32.totalorder %s85, %s88
      %p94 = scmp.eq.s32.totalorder %s28, 0
      %p95 = por %p93, %p94
      %p96 = scmp.ne.s32.totalorder %s85, %s88
      %p97 = scmp.eq.s32.totalorder %s33, 15
      %p98 = por %p96, %p97
      %p99 = scmp.ne.s32.totalorder %s88, %s89
      %p100 = scmp.eq.s32.totalorder %s33, 0
      %p101 = por %p99, %p100
      %p102 = scmp.ne.s32.totalorder %s88, %s89
      %p103 = scmp.eq.s32.totalorder %s34, 15
      %p104 = por %p102, %p103
      %p106 = scmp.ne.s32.totalorder %s89, %s105
      %p107 = scmp.eq.s32.totalorder %s34, 0
      %p108 = por %p106, %p107
      %s109 = ssub.s32 %s36, %s50
      %s110 = ssub.s32 %s37, %s46
      %s111 = sor.u32 %s109, %s110
      %p112 = scmp.eq.s32.totalorder %s111, 0
      %s114 = sadd.s32 %s113, 1
      %s115 = scalar_select %p112, %s113, %s114
      %p118 = pneg %p112
      %p119 = scmp.eq.s32.totalorder %s28, 15
      %p120 = por %p118, %p119
      %p121 = scmp.ne.s32.totalorder %s113, %s116
      %p122 = scmp.eq.s32.totalorder %s28, 0
      %p123 = por %p121, %p122
      %p124 = scmp.ne.s32.totalorder %s113, %s116
      %p125 = scmp.eq.s32.totalorder %s33, 15
      %p126 = por %p124, %p125
      %p127 = scmp.ne.s32.totalorder %s116, %s117
      %p128 = scmp.eq.s32.totalorder %s33, 0
      %p129 = por %p127, %p128
      %p130 = scmp.ne.s32.totalorder %s116, %s117
      %p131 = scmp.eq.s32.totalorder %s34, 15
      %p132 = por %p130, %p131
      %p134 = scmp.ne.s32.totalorder %s117, %s133
      %p135 = scmp.eq.s32.totalorder %s34, 0
      %p136 = por %p134, %p135
      %s137 = ssub.s32 %s36, %s50
      %s138 = ssub.s32 %s37, %s46
      %s139 = sor.u32 %s137, %s138
      %p140 = scmp.eq.s32.totalorder %s139, 0
      %s142 = sadd.s32 %s141, 1
      %s143 = scalar_select %p140, %s141, %s142
      %p146 = pneg %p140
      %p147 = scmp.eq.s32.totalorder %s28, 15
      %p148 = por %p146, %p147
      %p149 = scmp.ne.s32.totalorder %s141, %s144
      %p150 = scmp.eq.s32.totalorder %s28, 0
      %p151 = por %p149, %p150
      %p152 = scmp.ne.s32.totalorder %s141, %s144
      %p153 = scmp.eq.s32.totalorder %s33, 15
      %p154 = por %p152, %p153
      %p155 = scmp.ne.s32.totalorder %s144, %s145
      %p156 = scmp.eq.s32.totalorder %s33, 0
      %p157 = por %p155, %p156
      %p158 = scmp.ne.s32.totalorder %s144, %s145
      %p159 = scmp.eq.s32.totalorder %s34, 15
      %p160 = por %p158, %p159
      %p162 = scmp.ne.s32.totalorder %s145, %s161
      %p163 = scmp.eq.s32.totalorder %s34, 0
      %p164 = por %p162, %p163
      %s165 = ssub.s32 %s36, %s50
      %s166 = ssub.s32 %s37, %s46
      %s167 = sor.u32 %s165, %s166
      %p168 = scmp.eq.s32.totalorder %s167, 0
      %s170 = sadd.s32 %s169, 1
      %s171 = scalar_select %p168, %s169, %s170
      %p174 = pneg %p168
      %p175 = scmp.eq.s32.totalorder %s28, 15
      %p176 = por %p174, %p175
      %p177 = scmp.ne.s32.totalorder %s169, %s172
      %p178 = scmp.eq.s32.totalorder %s28, 0
      %p179 = por %p177, %p178
      %p180 = scmp.ne.s32.totalorder %s169, %s172
      %p181 = scmp.eq.s32.totalorder %s33, 15
      %p182 = por %p180, %p181
      %p183 = scmp.ne.s32.totalorder %s172, %s173
      %p184 = scmp.eq.s32.totalorder %s33, 0
      %p185 = por %p183, %p184
      %p186 = scmp.ne.s32.totalorder %s172, %s173
      %p187 = scmp.eq.s32.totalorder %s34, 15
      %p188 = por %p186, %p187
      %p190 = scmp.ne.s32.totalorder %s173, %s189
      %p191 = scmp.eq.s32.totalorder %s34, 0
      %p192 = por %p190, %p191
      %s193 = ssub.s32 %s35, %s54
      %p194 = scmp.eq.s32.totalorder %s193, 0
      %s196 = sadd.s32 %s195, 1
      %s197 = scalar_select %p194, %s195, %s196
      %p200 = pneg %p194
      %p201 = scmp.eq.s32.totalorder %s28, 15
      %p202 = por %p200, %p201
      %p203 = scmp.ne.s32.totalorder %s195, %s198
      %p204 = scmp.eq.s32.totalorder %s28, 0
      %p205 = por %p203, %p204
      %p206 = scmp.ne.s32.totalorder %s195, %s198
      %p207 = scmp.eq.s32.totalorder %s33, 15
      %p208 = por %p206, %p207
      %p209 = scmp.ne.s32.totalorder %s198, %s199
      %p210 = scmp.eq.s32.totalorder %s33, 0
      %p211 = por %p209, %p210
      %p212 = scmp.ne.s32.totalorder %s198, %s199
      %p213 = scmp.eq.s32.totalorder %s34, 15
      %p214 = por %p212, %p213
      %p216 = scmp.ne.s32.totalorder %s199, %s215
      %p217 = scmp.eq.s32.totalorder %s34, 0
      %p218 = por %p216, %p217
      %p219 = scmp.le.s32.totalorder 1, %s28
      %p220 = scmp.lt.s32.totalorder %s28, 17
      %p221 = pnand %p219, %p220
      %p222 = pneg %p221
      // Predicated region
      $region9: #{moe_forward.1} parent=5 // pred_check
        _
      $region10: #{moe_forward.1} parent=5 // pred_check_branch
        %224 = sbr.rel (%p221) target = $region12
      $region11: #{moe_forward.1} parent=5 // pred_region
        %s225 = ssub.s32 %s28, 1
      $region12: #{moe_forward.1} parent=5 // pred_fallthru
        _
      %p226 = scmp.lt.s32.totalorder %s28, 16
      // Predicated region
      $region13: #{moe_forward.1} parent=5 // pred_check
        %p227 = pneg %p226
      $region14: #{moe_forward.1} parent=5 // pred_check_branch
        %229 = sbr.rel (%p227) target = $region16
      $region15: #{moe_forward.1} parent=5 // pred_region
        // Predicated region
        $region17: #{moe_forward.1} parent=15 // pred_check
          %p230 = pneg %p67
        $region18: #{moe_forward.1} parent=15 // pred_check_branch
          %232 = sbr.rel (%p230) target = $region20
        $region19: #{moe_forward.1} parent=15 // pred_region
          %s233 = sand.u32 %s57, 1
          %s234 = scalar_lea.sflag [#allocation5], %s233
          %s235 = sand.u32 %s57, 1
          %s236 = smul.addr %s235, 16
          %s237 = scalar_lea.vmem [#allocation4], %s236
          %s238 = smul.u32 4, %s35
          %s240 = ssub.s32 256, 256
          %241 = vsyncadd %s234, %s240
          %s242 = smul.addr %s238, 64
          %s243 = scalar_lea.hbm %s1, %s242
          %s244 = sshll.u32 %s237, 4
          %s245 = int_to_ptr.vmem [resolvable:$true] %s244
          %250 = dma.hbm_to_vmem [thread:$0]  %s243, 256, %s245, %s234, 64, 64, 4
        $region20: #{moe_forward.1} parent=15 // pred_fallthru
          _
        // Predicated region
        $region21: #{moe_forward.1} parent=15 // pred_check
          %p251 = pneg %p95
        $region22: #{moe_forward.1} parent=15 // pred_check_branch
          %253 = sbr.rel (%p251) target = $region24
        $region23: #{moe_forward.1} parent=15 // pred_region
          %s254 = sand.u32 %s28, 1
          %s255 = scalar_lea.sflag [#allocation8], %s254
          %s256 = sand.u32 %s85, 1
          %s257 = smul.addr %s256, 32
          %s258 = scalar_lea.vmem [#allocation7], %s257
          %s259 = smul.u32 4, %s35
          %s261 = ssub.s32 512, 512
          %262 = vsyncadd %s255, %s261
          %s263 = smul.addr %s36, 8
          %s264 = sadd.s32 %s259, %s263
          %s265 = smul.addr %s264, 128
          %s266 = scalar_lea.hbm %s2, %s265
          %s267 = sshll.u32 %s258, 4
          %s268 = int_to_ptr.vmem [resolvable:$true] %s267
          %273 = dma.hbm_to_vmem [thread:$0]  %s266, 512, %s268, %s255, 128, 128, 8
        $region24: #{moe_forward.1} parent=15 // pred_fallthru
          _
        // Predicated region
        $region25: #{moe_forward.1} parent=15 // pred_check
          %p274 = pneg %p123
        $region26: #{moe_forward.1} parent=15 // pred_check_branch
          %276 = sbr.rel (%p274) target = $region28
        $region27: #{moe_forward.1} parent=15 // pred_region
          %s277 = sand.u32 %s28, 1
          %s278 = scalar_lea.sflag [#allocation8], %s277
          %s279 = sand.u32 %s113, 1
          %s280 = smul.addr %s279, 64
          %s281 = scalar_lea.vmem [#allocation9], %s280
          %s283 = ssub.s32 1024, 1024
          %284 = vsyncadd %s278, %s283
          %s285 = smul.addr %s36, 32
          %s286 = sadd.s32 %s37, %s285
          %s287 = smul.addr %s286, 64
          %s288 = scalar_lea.hbm %s3, %s287
          %s289 = sshll.u32 %s281, 4
          %s290 = int_to_ptr.vmem [resolvable:$true] %s289
          %295 = dma.hbm_to_vmem [thread:$0]  %s288, 1024, %s290, %s278, 128, 64, 4
        $region28: #{moe_forward.1} parent=15 // pred_fallthru
          _
        // Predicated region
        $region29: #{moe_forward.1} parent=15 // pred_check
          %p296 = pneg %p151
        $region30: #{moe_forward.1} parent=15 // pred_check_branch
          %298 = sbr.rel (%p296) target = $region32
        $region31: #{moe_forward.1} parent=15 // pred_region
          %s299 = sand.u32 %s28, 1
          %s300 = scalar_lea.sflag [#allocation11], %s299
          %s301 = sand.u32 %s141, 1
          %s302 = smul.addr %s301, 64
          %s303 = scalar_lea.vmem [#allocation10], %s302
          %s305 = ssub.s32 1024, 1024
          %306 = vsyncadd %s300, %s305
          %s307 = smul.addr %s36, 32
          %s308 = sadd.s32 %s37, %s307
          %s309 = smul.addr %s308, 64
          %s310 = scalar_lea.hbm %s4, %s309
          %s311 = sshll.u32 %s303, 4
          %s312 = int_to_ptr.vmem [resolvable:$true] %s311
          %317 = dma.hbm_to_vmem [thread:$0]  %s310, 1024, %s312, %s300, 128, 64, 4
        $region32: #{moe_forward.1} parent=15 // pred_fallthru
          _
        // Predicated region
        $region33: #{moe_forward.1} parent=15 // pred_check
          %p318 = pneg %p179
        $region34: #{moe_forward.1} parent=15 // pred_check_branch
          %320 = sbr.rel (%p318) target = $region36
        $region35: #{moe_forward.1} parent=15 // pred_region
          %s321 = sand.u32 %s28, 1
          %s322 = scalar_lea.sflag [#allocation11], %s321
          %s323 = sand.u32 %s169, 1
          %s324 = smul.addr %s323, 64
          %s325 = scalar_lea.vmem [#allocation12], %s324
          %s326 = smul.u32 16, %s37
          %s328 = ssub.s32 1024, 1024
          %329 = vsyncadd %s322, %s328
          %s330 = smul.addr %s36, 32
          %s331 = sadd.s32 %s326, %s330
          %s332 = smul.addr %s331, 64
          %s333 = scalar_lea.hbm %s5, %s332
          %s334 = sshll.u32 %s325, 4
          %s335 = int_to_ptr.vmem [resolvable:$true] %s334
          %340 = dma.hbm_to_vmem [thread:$0]  %s333, 1024, %s335, %s322, 64, 64, 4
        $region36: #{moe_forward.1} parent=15 // pred_fallthru
          _
      $region16: #{moe_forward.1} parent=5 // pred_fallthru
        _
      %p341 = scmp.le.s32.totalorder 1, %s28
      %p342 = scmp.lt.s32.totalorder %s28, 17
      %p343 = pnand %p341, %p342
      %p344 = pneg %p343
      // Predicated region
      $region37: #{moe_forward.1} parent=5 // pred_check
        _
      $region38: #{moe_forward.1} parent=5 // pred_check_branch
        %346 = sbr.rel (%p343) target = $region40
      $region39: #{moe_forward.1} parent=5 // pred_region
        %s347 = ssub.s32 %s28, 1
        %s348 = sand.u32 %s60, 1
        %s349 = scalar_lea.sflag [#allocation5], %s348
        %s350 = sand.u32 %s60, 1
        %s351 = smul.addr %s350, 16
        %s352 = scalar_lea.vmem [#allocation4], %s351
        // Predicated region
        $region41: #{moe_forward.1} parent=39 // pred_check
          %p353 = pneg %p73
        $region42: #{moe_forward.1} parent=39 // pred_check_branch
          %355 = sbr.rel (%p353) target = $region44
        $region43: #{moe_forward.1} parent=39 // pred_region
          %356 = dma.done %s349, 256
        $region44: #{moe_forward.1} parent=39 // pred_fallthru
          _
        %s357 = sand.u32 %s33, 1
        %s358 = scalar_lea.sflag [#allocation8], %s357
        %s359 = sand.u32 %s88, 1
        %s360 = smul.addr %s359, 32
        %s361 = scalar_lea.vmem [#allocation7], %s360
        // Predicated region
        $region45: #{moe_forward.1} parent=39 // pred_check
          %p362 = pneg %p101
        $region46: #{moe_forward.1} parent=39 // pred_check_branch
          %364 = sbr.rel (%p362) target = $region48
        $region47: #{moe_forward.1} parent=39 // pred_region
          %365 = dma.done %s358, 512
        $region48: #{moe_forward.1} parent=39 // pred_fallthru
          _
        %s366 = sand.u32 %s33, 1
        %s367 = scalar_lea.sflag [#allocation8], %s366
        %s368 = sand.u32 %s116, 1
        %s369 = smul.addr %s368, 64
        %s370 = scalar_lea.vmem [#allocation9], %s369
        // Predicated region
        $region49: #{moe_forward.1} parent=39 // pred_check
          %p371 = pneg %p129
        $region50: #{moe_forward.1} parent=39 // pred_check_branch
          %373 = sbr.rel (%p371) target = $region52
        $region51: #{moe_forward.1} parent=39 // pred_region
          %374 = dma.done %s367, 1024
        $region52: #{moe_forward.1} parent=39 // pred_fallthru
          _
        %s375 = sand.u32 %s33, 1
        %s376 = scalar_lea.sflag [#allocation11], %s375
        %s377 = sand.u32 %s144, 1
        %s378 = smul.addr %s377, 64
        %s379 = scalar_lea.vmem [#allocation10], %s378
        // Predicated region
        $region53: #{moe_forward.1} parent=39 // pred_check
          %p380 = pneg %p157
        $region54: #{moe_forward.1} parent=39 // pred_check_branch
          %382 = sbr.rel (%p380) target = $region56
        $region55: #{moe_forward.1} parent=39 // pred_region
          %383 = dma.done %s376, 1024
        $region56: #{moe_forward.1} parent=39 // pred_fallthru
          _
        %s384 = sand.u32 %s33, 1
        %s385 = scalar_lea.sflag [#allocation11], %s384
        %s386 = sand.u32 %s172, 1
        %s387 = smul.addr %s386, 64
        %s388 = scalar_lea.vmem [#allocation12], %s387
        // Predicated region
        $region57: #{moe_forward.1} parent=39 // pred_check
          %p389 = pneg %p185
        $region58: #{moe_forward.1} parent=39 // pred_check_branch
          %391 = sbr.rel (%p389) target = $region60
        $region59: #{moe_forward.1} parent=39 // pred_region
          %392 = dma.done %s385, 1024
        $region60: #{moe_forward.1} parent=39 // pred_fallthru
          _
        %s393 = sand.u32 %s60, 1
        %s394 = scalar_lea.sflag [#allocation5], %s393
        %s395 = sand.u32 %s60, 1
        %s396 = smul.addr %s395, 16
        %s397 = scalar_lea.vmem [#allocation4], %s396
        %p398 = pneg %p73
        %p399 = pneg %p70
        %s400 = sand.u32 %s33, 1
        %s401 = scalar_lea.sflag [#allocation8], %s400
        %s402 = sand.u32 %s88, 1
        %s403 = smul.addr %s402, 32
        %s404 = scalar_lea.vmem [#allocation7], %s403
        %p405 = pneg %p101
        %p406 = pneg %p98
        %s407 = sand.u32 %s33, 1
        %s408 = scalar_lea.sflag [#allocation8], %s407
        %s409 = sand.u32 %s116, 1
        %s410 = smul.addr %s409, 64
        %s411 = scalar_lea.vmem [#allocation9], %s410
        %p412 = pneg %p129
        %p413 = pneg %p126
        %s414 = sand.u32 %s33, 1
        %s415 = scalar_lea.sflag [#allocation11], %s414
        %s416 = sand.u32 %s144, 1
        %s417 = smul.addr %s416, 64
        %s418 = scalar_lea.vmem [#allocation10], %s417
        %p419 = pneg %p157
        %p420 = pneg %p154
        %s421 = sand.u32 %s33, 1
        %s422 = scalar_lea.sflag [#allocation11], %s421
        %s423 = sand.u32 %s172, 1
        %s424 = smul.addr %s423, 64
        %s425 = scalar_lea.vmem [#allocation12], %s424
        %p426 = pneg %p185
        %p427 = pneg %p182
        %p428 = pneg %p211
        %p429 = pneg %p208
        %s430 = sand.u32 %s198, 1
        %s431 = scalar_lea.sflag [#allocation6], %s430
        %s432 = sand.u32 %s198, 1
        %s433 = smul.addr %s432, 32
        %s434 = scalar_lea.vmem [#allocation13], %s433
        %s435 = smul.u32 4, %s38
        %s436 = smul.u32 4, %s38
        %s437 = smul.u32 16, %s40
        %s438 = smul.u32 4, %s38
        %p440 = scmp.eq.s32.totalorder %s39, 0
        %p441 = scmp.eq.s32.totalorder %s40, 0
        %p442 = pnand %p440, %p441
        %p443 = pneg %p442
        // Predicated region
        $region61: #{moe_forward.1} parent=39 // pred_check
          _
        $region62: #{moe_forward.1} parent=39 // pred_check_branch
          %445 = sbr.rel (%p442) target = $region64
        $region63: #{moe_forward.1} parent=39 // pred_region
          %446 = vst [vmem:[%s434] sm:$0xff] 0.0
          %447 = vst [vmem:[%s434 + $0x8] sm:$0xff] 0.0
          %448 = vst [vmem:[%s434 + $0x10] sm:$0xff] 0.0
          %449 = vst [vmem:[%s434 + $0x18] sm:$0xff] 0.0
        $region64: #{moe_forward.1} parent=39 // pred_fallthru
          _
        %s450 = sshra.s32 %s39, 7
        %s451 = sand.u32 %s39, 127
        %s452 = sadd.s32 %s450, %s38
        %s453 = smul.u32 %s452, 128
        %s454 = sshra.s32 %s39, 7
        %s455 = sand.u32 %s39, 127
        %s456 = sadd.s32 %s453, %s455
        %s457 = sld [smem:[#allocation3 + %s456]]
        %p458 = scmp.gt.s32.totalorder %s457, 0
        // Predicated region
        $region65: #{moe_forward.1} parent=39 // pred_check
          %p459 = pneg %p458
        $region66: #{moe_forward.1} parent=39 // pred_check_branch
          %461 = sbr.rel (%p459) target = $region68
        $region67: #{moe_forward.1} parent=39 // pred_region
          %v462 = vld [vmem:[%s352] sm:$0xf]
          %v463 = vld [vmem:[%s352 + $0x4] sm:$0xf]
          %v464 = vld [vmem:[%s352 + $0x8] sm:$0xf]
          %v465 = vld [vmem:[%s352 + $0xc] sm:$0xf]
          %v466 = vld [vmem:[%s370] sm:$0xf]
          %v467 = vld [vmem:[%s370 + $0x4] sm:$0xf]
          %v468 = vld [vmem:[%s370 + $0x8] sm:$0xf]
          %v469 = vld [vmem:[%s370 + $0xc] sm:$0xf]
          %v470 = vld [vmem:[%s370 + $0x10] sm:$0xf]
          %v471 = vld [vmem:[%s370 + $0x14] sm:$0xf]
          %v472 = vld [vmem:[%s370 + $0x18] sm:$0xf]
          %v473 = vld [vmem:[%s370 + $0x1c] sm:$0xf]
          %v474 = vld [vmem:[%s370 + $0x20] sm:$0xf]
          %v475 = vld [vmem:[%s370 + $0x24] sm:$0xf]
          %v476 = vld [vmem:[%s370 + $0x28] sm:$0xf]
          %v477 = vld [vmem:[%s370 + $0x2c] sm:$0xf]
          %v478 = vld [vmem:[%s370 + $0x30] sm:$0xf]
          %v479 = vld [vmem:[%s370 + $0x34] sm:$0xf]
          %v480 = vld [vmem:[%s370 + $0x38] sm:$0xf]
          %v481 = vld [vmem:[%s370 + $0x3c] sm:$0xf]
          %v486 = vunpack.c.l.b16 %v462
          %v487 = vunpack.c.l.b16 %v463
          %v488 = vunpack.c.l.b16 %v464
          %v489 = vunpack.c.l.b16 %v465
          %v490 = vpack.c.b16 %v487, %v486
          %v491 = vpack.c.b16 %v489, %v488
          %v510 = vunpack.c.l.b16 %v466
          %v511 = vunpack.c.l.b16 %v467
          %v512 = vunpack.c.l.b16 %v468
          %v513 = vunpack.c.l.b16 %v469
          %v514 = vunpack.c.l.b16 %v470
          %v515 = vunpack.c.l.b16 %v471
          %v516 = vunpack.c.l.b16 %v472
          %v517 = vunpack.c.l.b16 %v473
          %v518 = vunpack.c.l.b16 %v474
          %v519 = vunpack.c.l.b16 %v475
          %v520 = vunpack.c.l.b16 %v476
          %v521 = vunpack.c.l.b16 %v477
          %v522 = vunpack.c.l.b16 %v478
          %v523 = vunpack.c.l.b16 %v479
          %v524 = vunpack.c.l.b16 %v480
          %v525 = vunpack.c.l.b16 %v481
          %v526 = vpack.c.b16 %v511, %v510
          %v527 = vpack.c.b16 %v513, %v512
          %v528 = vpack.c.b16 %v515, %v514
          %v529 = vpack.c.b16 %v517, %v516
          %v530 = vpack.c.b16 %v519, %v518
          %v531 = vpack.c.b16 %v521, %v520
          %v532 = vpack.c.b16 %v523, %v522
          %v533 = vpack.c.b16 %v525, %v524
          %542 = vmatprep.subr.bf16.mxu0 0
          %543 = vmatpush1.bf16.msra.mxu0 %v526
          %544 = vmatprep.subr.bf16.mxu0 0
          %545 = vmatpush1.bf16.msra.mxu0 %v527
          %546 = vmatprep.subr.bf16.mxu0 0
          %547 = vmatpush1.bf16.msra.mxu0 %v528
          %548 = vmatprep.subr.bf16.mxu0 0
          %549 = vmatpush1.bf16.msra.mxu0 %v529
          %550 = vmatprep.subr.bf16.mxu0 0
          %551 = vmatpush1.bf16.msra.mxu0 %v530
          %552 = vmatprep.subr.bf16.mxu0 0
          %553 = vmatpush1.bf16.msra.mxu0 %v531
          %554 = vmatprep.subr.bf16.mxu0 0
          %555 = vmatpush1.bf16.msra.mxu0 %v532
          %556 = vmatprep.subr.bf16.mxu0 0
          %557 = vmatpush1.bf16.msra.mxu0 %v533
          %558 = vmatprep.subr.bf16.mxu0 0
          %559 = vmatpush1.bf16.msra.mxu0 0
          %560 = vmatprep.subr.bf16.mxu0 0
          %561 = vmatpush1.bf16.msra.mxu0 0
          %562 = vmatprep.subr.bf16.mxu0 0
          %563 = vmatpush1.bf16.msra.mxu0 0
          %564 = vmatprep.subr.bf16.mxu0 0
          %565 = vmatpush1.bf16.msra.mxu0 0
          %566 = vmatprep.subr.bf16.mxu0 0
          %567 = vmatpush1.bf16.msra.mxu0 0
          %568 = vmatprep.subr.bf16.mxu0 0
          %569 = vmatpush1.bf16.msra.mxu0 0
          %570 = vmatprep.subr.bf16.mxu0 0
          %571 = vmatpush1.bf16.msra.mxu0 0
          %572 = vmatprep.subr.bf16.mxu0 0
          %573 = vmatpush1.bf16.msra.mxu0 0
          %574 = vmatprep.mubr.bf16.mxu0 0
          %575 = vmatmul.mubr.bf16.gmra.mrb[0].mxu0 %v490
          %v576 = vpop.f32.mrb[0].mxu0
          %v577 = vadd.f32 0.0, %v576
          %v578 = vpop.f32.mrb[0].mxu0
          %v579 = vpop.f32.mrb[0].mxu0
          %v580 = vadd.f32 0.0, %v579
          %v581 = vpop.f32.mrb[0].mxu0
          %582 = vmatprep.mubr.bf16.mxu0 0
          %583 = vmatmul.mubr.bf16.gmra.mrb[0].mxu0 %v491
          %v584 = vpop.f32.mrb[0].mxu0
          %v585 = vadd.f32 0.0, %v584
          %v586 = vpop.f32.mrb[0].mxu0
          %v587 = vpop.f32.mrb[0].mxu0
          %v588 = vadd.f32 0.0, %v587
          %v589 = vpop.f32.mrb[0].mxu0
          %590 = vdwg.mxu0
          %v591 = vld [vmem:[%s379] sm:$0xf]
          %v592 = vld [vmem:[%s379 + $0x4] sm:$0xf]
          %v593 = vld [vmem:[%s379 + $0x8] sm:$0xf]
          %v594 = vld [vmem:[%s379 + $0xc] sm:$0xf]
          %v595 = vld [vmem:[%s379 + $0x10] sm:$0xf]
          %v596 = vld [vmem:[%s379 + $0x14] sm:$0xf]
          %v597 = vld [vmem:[%s379 + $0x18] sm:$0xf]
          %v598 = vld [vmem:[%s379 + $0x1c] sm:$0xf]
          %v599 = vld [vmem:[%s379 + $0x20] sm:$0xf]
          %v600 = vld [vmem:[%s379 + $0x24] sm:$0xf]
          %v601 = vld [vmem:[%s379 + $0x28] sm:$0xf]
          %v602 = vld [vmem:[%s379 + $0x2c] sm:$0xf]
          %v603 = vld [vmem:[%s379 + $0x30] sm:$0xf]
          %v604 = vld [vmem:[%s379 + $0x34] sm:$0xf]
          %v605 = vld [vmem:[%s379 + $0x38] sm:$0xf]
          %v606 = vld [vmem:[%s379 + $0x3c] sm:$0xf]
          %v623 = vunpack.c.l.b16 %v591
          %v624 = vunpack.c.l.b16 %v592
          %v625 = vunpack.c.l.b16 %v593
          %v626 = vunpack.c.l.b16 %v594
          %v627 = vunpack.c.l.b16 %v595
          %v628 = vunpack.c.l.b16 %v596
          %v629 = vunpack.c.l.b16 %v597
          %v630 = vunpack.c.l.b16 %v598
          %v631 = vunpack.c.l.b16 %v599
          %v632 = vunpack.c.l.b16 %v600
          %v633 = vunpack.c.l.b16 %v601
          %v634 = vunpack.c.l.b16 %v602
          %v635 = vunpack.c.l.b16 %v603
          %v636 = vunpack.c.l.b16 %v604
          %v637 = vunpack.c.l.b16 %v605
          %v638 = vunpack.c.l.b16 %v606
          %v639 = vpack.c.b16 %v624, %v623
          %v640 = vpack.c.b16 %v626, %v625
          %v641 = vpack.c.b16 %v628, %v627
          %v642 = vpack.c.b16 %v630, %v629
          %v643 = vpack.c.b16 %v632, %v631
          %v644 = vpack.c.b16 %v634, %v633
          %v645 = vpack.c.b16 %v636, %v635
          %v646 = vpack.c.b16 %v638, %v637
          %655 = vmatprep.subr.bf16.mxu0 0
          %656 = vmatpush1.bf16.msra.mxu0 %v639
          %657 = vmatprep.subr.bf16.mxu0 0
          %658 = vmatpush1.bf16.msra.mxu0 %v640
          %659 = vmatprep.subr.bf16.mxu0 0
          %660 = vmatpush1.bf16.msra.mxu0 %v641
          %661 = vmatprep.subr.bf16.mxu0 0
          %662 = vmatpush1.bf16.msra.mxu0 %v642
          %663 = vmatprep.subr.bf16.mxu0 0
          %664 = vmatpush1.bf16.msra.mxu0 %v643
          %665 = vmatprep.subr.bf16.mxu0 0
          %666 = vmatpush1.bf16.msra.mxu0 %v644
          %667 = vmatprep.subr.bf16.mxu0 0
          %668 = vmatpush1.bf16.msra.mxu0 %v645
          %669 = vmatprep.subr.bf16.mxu0 0
          %670 = vmatpush1.bf16.msra.mxu0 %v646
          %671 = vmatprep.subr.bf16.mxu0 0
          %672 = vmatpush1.bf16.msra.mxu0 0
          %673 = vmatprep.subr.bf16.mxu0 0
          %674 = vmatpush1.bf16.msra.mxu0 0
          %675 = vmatprep.subr.bf16.mxu0 0
          %676 = vmatpush1.bf16.msra.mxu0 0
          %677 = vmatprep.subr.bf16.mxu0 0
          %678 = vmatpush1.bf16.msra.mxu0 0
          %679 = vmatprep.subr.bf16.mxu0 0
          %680 = vmatpush1.bf16.msra.mxu0 0
          %681 = vmatprep.subr.bf16.mxu0 0
          %682 = vmatpush1.bf16.msra.mxu0 0
          %683 = vmatprep.subr.bf16.mxu0 0
          %684 = vmatpush1.bf16.msra.mxu0 0
          %685 = vmatprep.subr.bf16.mxu0 0
          %686 = vmatpush1.bf16.msra.mxu0 0
          %687 = vmatprep.mubr.bf16.mxu0 0
          %688 = vmatmul.mubr.bf16.gmra.mrb[0].mxu0 %v490
          %v689 = vpop.f32.mrb[0].mxu0
          %v690 = vadd.f32 0.0, %v689
          %v691 = vpop.f32.mrb[0].mxu0
          %v692 = vpop.f32.mrb[0].mxu0
          %v693 = vadd.f32 0.0, %v692
          %v694 = vpop.f32.mrb[0].mxu0
          %695 = vmatprep.mubr.bf16.mxu0 0
          %696 = vmatmul.mubr.bf16.gmra.mrb[0].mxu0 %v491
          %v697 = vpop.f32.mrb[0].mxu0
          %v698 = vadd.f32 0.0, %v697
          %v699 = vpop.f32.mrb[0].mxu0
          %v700 = vpop.f32.mrb[0].mxu0
          %v701 = vadd.f32 0.0, %v700
          %v702 = vpop.f32.mrb[0].mxu0
          %703 = vdwg.mxu0
          %v704 = vxor.u32 %v577, 2147483648
          %v705 = vxor.u32 %v580, 2147483648
          %v706 = vxor.u32 %v585, 2147483648
          %v707 = vxor.u32 %v588, 2147483648
          %v708 = vmul.f32 %v704, 1.442695
          %v709 = vpow.pop %v708
          %v710 = vmul.f32 %v705, 1.442695
          %v711 = vpow.pop %v710
          %v712 = vmul.f32 %v706, 1.442695
          %v713 = vpow.pop %v712
          %v714 = vmul.f32 %v707, 1.442695
          %v715 = vpow.pop %v714
          %v716 = vadd.f32 %v709, 1.0
          %v717 = vadd.f32 %v711, 1.0
          %v718 = vadd.f32 %v713, 1.0
          %v719 = vadd.f32 %v715, 1.0
          %v720 = vrcp.pop %v716
          %v721 = vmul.f32 1.0, %v720
          %v722 = vrcp.pop %v717
          %v723 = vmul.f32 1.0, %v722
          %v724 = vrcp.pop %v718
          %v725 = vmul.f32 1.0, %v724
          %v726 = vrcp.pop %v719
          %v727 = vmul.f32 1.0, %v726
          %v728 = vmul.f32 %v577, %v721
          %v729 = vmul.f32 %v580, %v723
          %v730 = vmul.f32 %v585, %v725
          %v731 = vmul.f32 %v588, %v727
          %v732 = vmul.f32 %v728, %v690
          %v733 = vmul.f32 %v729, %v693
          %v734 = vmul.f32 %v730, %v698
          %v735 = vmul.f32 %v731, %v701
          %v736 = vpack.c.bf16 %v733, %v732
          %v737 = vpack.c.bf16 %v735, %v734
          %v738 = vld [vmem:[%s388] sm:$0xf]
          %v739 = vld [vmem:[%s388 + $0x4] sm:$0xf]
          %v740 = vld [vmem:[%s388 + $0x8] sm:$0xf]
          %v741 = vld [vmem:[%s388 + $0xc] sm:$0xf]
          %v742 = vld [vmem:[%s388 + $0x10] sm:$0xf]
          %v743 = vld [vmem:[%s388 + $0x14] sm:$0xf]
          %v744 = vld [vmem:[%s388 + $0x18] sm:$0xf]
          %v745 = vld [vmem:[%s388 + $0x1c] sm:$0xf]
          %v746 = vld [vmem:[%s388 + $0x20] sm:$0xf]
          %v747 = vld [vmem:[%s388 + $0x24] sm:$0xf]
          %v748 = vld [vmem:[%s388 + $0x28] sm:$0xf]
          %v749 = vld [vmem:[%s388 + $0x2c] sm:$0xf]
          %v750 = vld [vmem:[%s388 + $0x30] sm:$0xf]
          %v751 = vld [vmem:[%s388 + $0x34] sm:$0xf]
          %v752 = vld [vmem:[%s388 + $0x38] sm:$0xf]
          %v753 = vld [vmem:[%s388 + $0x3c] sm:$0xf]
          %v770 = vunpack.c.l.b16 %v738
          %v771 = vunpack.c.l.b16 %v739
          %v772 = vunpack.c.l.b16 %v740
          %v773 = vunpack.c.l.b16 %v741
          %v774 = vunpack.c.l.b16 %v742
          %v775 = vunpack.c.l.b16 %v743
          %v776 = vunpack.c.l.b16 %v744
          %v777 = vunpack.c.l.b16 %v745
          %v778 = vunpack.c.l.b16 %v746
          %v779 = vunpack.c.l.b16 %v747
          %v780 = vunpack.c.l.b16 %v748
          %v781 = vunpack.c.l.b16 %v749
          %v782 = vunpack.c.l.b16 %v750
          %v783 = vunpack.c.l.b16 %v751
          %v784 = vunpack.c.l.b16 %v752
          %v785 = vunpack.c.l.b16 %v753
          %v786 = vpack.c.b16 %v771, %v770
          %v787 = vpack.c.b16 %v773, %v772
          %v788 = vpack.c.b16 %v775, %v774
          %v789 = vpack.c.b16 %v777, %v776
          %v790 = vpack.c.b16 %v779, %v778
          %v791 = vpack.c.b16 %v781, %v780
          %v792 = vpack.c.b16 %v783, %v782
          %v793 = vpack.c.b16 %v785, %v784
          %802 = vmatprep.subr.bf16.mxu0 0
          %803 = vmatpush1.bf16.msra.mxu0 %v786
          %804 = vmatprep.subr.bf16.mxu0 0
          %805 = vmatpush1.bf16.msra.mxu0 %v787
          %806 = vmatprep.subr.bf16.mxu0 0
          %807 = vmatpush1.bf16.msra.mxu0 %v788
          %808 = vmatprep.subr.bf16.mxu0 0
          %809 = vmatpush1.bf16.msra.mxu0 %v789
          %810 = vmatprep.subr.bf16.mxu0 0
          %811 = vmatpush1.bf16.msra.mxu0 %v790
          %812 = vmatprep.subr.bf16.mxu0 0
          %813 = vmatpush1.bf16.msra.mxu0 %v791
          %814 = vmatprep.subr.bf16.mxu0 0
          %815 = vmatpush1.bf16.msra.mxu0 %v792
          %816 = vmatprep.subr.bf16.mxu0 0
          %817 = vmatpush1.bf16.msra.mxu0 %v793
          %818 = vmatprep.subr.bf16.mxu0 0
          %819 = vmatpush1.bf16.msra.mxu0 0
          %820 = vmatprep.subr.bf16.mxu0 0
          %821 = vmatpush1.bf16.msra.mxu0 0
          %822 = vmatprep.subr.bf16.mxu0 0
          %823 = vmatpush1.bf16.msra.mxu0 0
          %824 = vmatprep.subr.bf16.mxu0 0
          %825 = vmatpush1.bf16.msra.mxu0 0
          %826 = vmatprep.subr.bf16.mxu0 0
          %827 = vmatpush1.bf16.msra.mxu0 0
          %828 = vmatprep.subr.bf16.mxu0 0
          %829 = vmatpush1.bf16.msra.mxu0 0
          %830 = vmatprep.subr.bf16.mxu0 0
          %831 = vmatpush1.bf16.msra.mxu0 0
          %832 = vmatprep.subr.bf16.mxu0 0
          %833 = vmatpush1.bf16.msra.mxu0 0
          %834 = vmatprep.mubr.bf16.mxu0 0
          %835 = vmatmul.mubr.bf16.gmra.mrb[0].mxu0 %v736
          %v836 = vpop.f32.mrb[0].mxu0
          %v837 = vadd.f32 0.0, %v836
          %v838 = vpop.f32.mrb[0].mxu0
          %v839 = vpop.f32.mrb[0].mxu0
          %v840 = vadd.f32 0.0, %v839
          %v841 = vpop.f32.mrb[0].mxu0
          %842 = vmatprep.mubr.bf16.mxu0 0
          %843 = vmatmul.mubr.bf16.gmra.mrb[0].mxu0 %v737
          %v844 = vpop.f32.mrb[0].mxu0
          %v845 = vadd.f32 0.0, %v844
          %v846 = vpop.f32.mrb[0].mxu0
          %v847 = vpop.f32.mrb[0].mxu0
          %v848 = vadd.f32 0.0, %v847
          %v849 = vpop.f32.mrb[0].mxu0
          %850 = vdwg.mxu0
          %v851 = vld [vmem:[%s434] sm:$0xff]
          %v852 = vld [vmem:[%s434 + $0x8] sm:$0xff]
          %v853 = vld [vmem:[%s434 + $0x10] sm:$0xff]
          %v854 = vld [vmem:[%s434 + $0x18] sm:$0xff]
          %v855 = vld [vmem:[%s361] sm:$0xff]
          %v856 = vld [vmem:[%s361 + $0x8] sm:$0xff]
          %v857 = vld [vmem:[%s361 + $0x10] sm:$0xff]
          %v858 = vld [vmem:[%s361 + $0x18] sm:$0xff]
          %860 = vset.pattern.permute.xlu0 0
          %861 = vperm.xlu0 %860, %v855
          %v862 = vpop.permute.xlu0 %861
          %865 = vset.pattern.permute.xlu0 0
          %866 = vperm.xlu0 %865, %v856
          %v867 = vpop.permute.xlu0 %866
          %870 = vset.pattern.permute.xlu0 0
          %871 = vperm.xlu0 %870, %v857
          %v872 = vpop.permute.xlu0 %871
          %875 = vset.pattern.permute.xlu0 0
          %876 = vperm.xlu0 %875, %v858
          %v877 = vpop.permute.xlu0 %876
          %v879 = vmul.f32 %v862, %v837
          %v880 = vmul.f32 %v867, %v840
          %v881 = vmul.f32 %v872, %v845
          %v882 = vmul.f32 %v877, %v848
          %v883 = vadd.f32 %v851, %v879
          %v884 = vadd.f32 %v852, %v880
          %v885 = vadd.f32 %v853, %v881
          %v886 = vadd.f32 %v854, %v882
          %887 = vst [vmem:[%s434] sm:$0xff] %v883
          %888 = vst [vmem:[%s434 + $0x8] sm:$0xff] %v884
          %889 = vst [vmem:[%s434 + $0x10] sm:$0xff] %v885
          %890 = vst [vmem:[%s434 + $0x18] sm:$0xff] %v886
        $region68: #{moe_forward.1} parent=39 // pred_fallthru
          _
        %s891 = sand.u32 %s198, 1
        %s892 = scalar_lea.sflag [#allocation6], %s891
        %s893 = sand.u32 %s198, 1
        %s894 = smul.addr %s893, 32
        %s895 = scalar_lea.vmem [#allocation13], %s894
        // Predicated region
        $region69: #{moe_forward.1} parent=39 // pred_check
          %p896 = pneg %p208
        $region70: #{moe_forward.1} parent=39 // pred_check_branch
          %898 = sbr.rel (%p896) target = $region72
        $region71: #{moe_forward.1} parent=39 // pred_region
          %s899 = smul.u32 4, %s38
          %s901 = ssub.s32 512, 512
          %902 = vsyncadd %s892, %s901
          %s903 = smul.addr %s899, 128
          %s904 = scalar_lea.hbm %s6, %s903
          %s905 = sshll.u32 %s895, 4
          %s906 = int_to_ptr.vmem [resolvable:$true] %s905
          %911 = dma.vmem_to_hbm [thread:$0]  %s906, 512, %s904, %s892, 128, 128, 8
        $region72: #{moe_forward.1} parent=39 // pred_fallthru
          _
      $region40: #{moe_forward.1} parent=5 // pred_fallthru
        _
      %p912 = scmp.le.s32.totalorder 2, %s28
      // Predicated region
      $region73: #{moe_forward.1} parent=5 // pred_check
        %p913 = pneg %p912
      $region74: #{moe_forward.1} parent=5 // pred_check_branch
        %915 = sbr.rel (%p913) target = $region76
      $region75: #{moe_forward.1} parent=5 // pred_region
        %s916 = ssub.s32 %s28, 2
        // Predicated region
        $region77: #{moe_forward.1} parent=75 // pred_check
          %p917 = pneg %p214
        $region78: #{moe_forward.1} parent=75 // pred_check_branch
          %919 = sbr.rel (%p917) target = $region80
        $region79: #{moe_forward.1} parent=75 // pred_region
          %s920 = sand.u32 %s199, 1
          %s921 = scalar_lea.sflag [#allocation6], %s920
          %s922 = sand.u32 %s199, 1
          %s923 = smul.addr %s922, 32
          %s924 = scalar_lea.vmem [#allocation13], %s923
          %925 = dma.done %s921, 512
        $region80: #{moe_forward.1} parent=75 // pred_fallthru
          _
      $region76: #{moe_forward.1} parent=5 // pred_fallthru
        _
    $region6: #{moe_forward.1} parent=1 // loop_footer
      %s32 = sadd.s32 1, %s28
    $region7: #{moe_forward.1} parent=1 // loop_footer_branch
      %27 = sbr.rel target = $region3
    $region8: #{moe_forward.1} parent=1 // loop_exit
      _
    %926 = vsyncpa [#allocation5], 1
    %s927 = scalar_lea.sflag [#allocation5], 1
    %928 = vsyncpa %s927, 1
    %929 = vsyncpa [#allocation8], 1
    %s930 = scalar_lea.sflag [#allocation8], 1
    %931 = vsyncpa %s930, 1
    %932 = vsyncpa [#allocation11], 1
    %s933 = scalar_lea.sflag [#allocation11], 1
    %934 = vsyncpa %s933, 1
    %935 = vsyncpa [#allocation6], 1
    %s936 = scalar_lea.sflag [#allocation6], 1
    %937 = vsyncpa %s936, 1

</llo_original>
